<compile_context>
chip_gen: v5e
topology: v5e:2x2
jax: 0.10.0
libtpu: 0.0.40
codegen_flags: <defaults>
</compile_context>

<pallas_src>
import jax
import jax.numpy as jnp
from jax.experimental import pallas as pl
from jax.experimental.pallas import tpu as pltpu

# Lane widths tried widest-first: full-vreg unmasked stores and fewer rows.
_LANE_WIDTHS = (1024, 512, 256, 128)
# Sublane-packing multiple per itemsize: f32/i32 -> 8, bf16/f16 -> 16, int8/fp8 -> 32.
_SUBLANE_PACK = {4: 8, 2: 16, 1: 32}


def _mul_zero_kernel(x_ref, o_ref):
    # One VPU multiply per vreg; preserves NaN/Inf -> NaN exactly like PyTorch's `0 * x`.
    o_ref[...] = x_ref[...] * jnp.array(0, dtype=x_ref.dtype)


def _tile_budget():
    """Return (tile_bytes, vmem_limit_bytes) tuned per TPU generation."""
    try:
        vmem_cap = pltpu.get_tpu_info().vmem_capacity_bytes
    except Exception:  # info unavailable -> conservative defaults (safe everywhere)
        return 4 << 20, 32 << 20
    if vmem_cap <= (64 << 20):
        # v7x: ~3.2 TB/s HBM makes the ~0.35 us/step overhead a 20-25% tax at 2 MiB
        # tiles -> use 8 MiB tiles; 4 double-buffered buffers = 32 MiB, so raise the
        # scoped limit (48 MiB, still under the 64 MiB physical VMEM).
        return 8 << 20, 48 << 20
    # v5e/v6e (128 MiB physical): 4 MiB tiles already reach ~85% of HBM roofline;
    # 4 buffers = 16 MiB sits exactly at v5e's default scoped limit, so bump it.
    return 4 << 20, 32 << 20


def clipped_tanh0_forward(x, *, small_input_threshold=1 << 16, donate_input=False):
    """Pallas implementation of ClippedTanh0.forward: returns 0 * x.

    Inputs with fewer than `small_input_threshold` elements, or whose element count is
    not divisible by any supported lane width, use XLA's fused `x * 0` instead: that is
    strictly faster there (no kernel-launch overhead, no pad/slice HBM copies).
    Set `donate_input=True` only when the caller donates `x` (aliases the output buffer
    onto the input, halving the HBM footprint).
    """
    total = x.size
    dtype = x.dtype

    def _xla_fallback():
        return x * jnp.array(0, dtype=dtype)

    if total == 0 or total < small_input_threshold:
        return _xla_fallback()

    # Widest lane width that exactly divides the element count (padding would turn the
    # minimal 2N bytes of HBM traffic into ~6N, so ragged sizes go to XLA instead).
    lane_width = next((w for w in _LANE_WIDTHS if total % w == 0), None)
    if lane_width is None:
        return _xla_fallback()

    orig_shape = x.shape
    x2d = x.reshape(-1, lane_width)
    rows = x2d.shape[0]

    itemsize = jnp.dtype(dtype).itemsize
    sublane = _SUBLANE_PACK.get(itemsize, 8)
    total_bytes = total * itemsize

    tile_bytes, vmem_limit = _tile_budget()

    # Byte-targeted row tile, rounded down to the sublane-packing multiple.
    tile_r = (tile_bytes // (lane_width * itemsize)) // sublane * sublane
    tile_r = max(tile_r, sublane)

    # Split into >= 2 roughly-equal grid steps whenever (a) the data doesn't fit one
    # tile, or (b) it's big enough (>= 2 MiB) that both v7x TensorCores should share it.
    split = rows > tile_r or (total_bytes >= (2 << 20) and rows >= 2 * sublane)
    if split:
        half = ((-(-rows // 2)) + sublane - 1) // sublane * sublane
        tile_r = max(sublane, min(tile_r, half))
    else:
        tile_r = rows  # single full-extent block (legal even when rows < 8)

    grid = (pl.cdiv(rows, tile_r),)

    out2d = pl.pallas_call(
        _mul_zero_kernel,
        out_shape=jax.ShapeDtypeStruct(x2d.shape, x2d.dtype),
        grid=grid,
        in_specs=[pl.BlockSpec((tile_r, lane_width), lambda i: (i, 0))],
        out_specs=pl.BlockSpec((tile_r, lane_width), lambda i: (i, 0)),
        compiler_params=pltpu.CompilerParams(
            # "parallel" shards the row grid across v7x's 2 TensorCores; free on v5e/v6e.
            dimension_semantics=("parallel",),
            vmem_limit_bytes=vmem_limit,
        ),
        cost_estimate=pl.CostEstimate(
            flops=total, transcendentals=0, bytes_accessed=2 * total * itemsize),
        input_output_aliases=({0: 0} if donate_input else {}),
    )(x2d)

    return out2d.reshape(orig_shape)


# NOTE: ClippedTanh0.__init__ defines no parameters, so there are no weights to set up.

if __name__ == "__main__":
    key = jax.random.PRNGKey(0)
    k1, k2 = jax.random.split(key)

    # Small NCHW activation consistent with the module's elementwise forward.
    x = jax.random.normal(k1, (2, 4, 16, 16), dtype=jnp.float32)

    # 1) Default path: below the small-input threshold -> fused XLA multiply.
    y = clipped_tanh0_forward(x)
    jax.block_until_ready(y)
    assert y.shape == x.shape and y.dtype == x.dtype
    assert bool(jnp.all(y == 0.0 * x))

    # 2) Force the Pallas kernel on the same small input to verify it compiles & runs.
    y_pallas = clipped_tanh0_forward(x, small_input_threshold=0)
    jax.block_until_ready(y_pallas)
    assert y_pallas.shape == x.shape and y_pallas.dtype == x.dtype
    assert bool(jnp.all(y_pallas == 0.0 * x))

    # 3) A bf16 input large enough to take the Pallas path by default (exercises the
    #    byte-targeted tiling / 16-row sublane packing for 2-byte dtypes).
    xb = jax.random.normal(k2, (8, 128, 256), dtype=jnp.bfloat16)
    yb = clipped_tanh0_forward(xb)
    jax.block_until_ready(yb)
    refb = xb * jnp.array(0, dtype=xb.dtype)
    assert yb.shape == xb.shape and yb.dtype == xb.dtype
    assert bool(jnp.all(yb == refb))

    print("KERNEL_OK")
</pallas_src>

<mosaic_0001>
module attributes {stable_mosaic.version = 11 : i64} {
  func.func @_mul_zero_kernel(%arg0: i32, %arg1: memref<2x1024xf32, #tpu.memory_space<vmem>>, %arg2: memref<2x1024xf32, #tpu.memory_space<vmem>>) attributes {dimension_semantics = [#tpu.dimension_semantics<parallel>], iteration_bounds = array<i64: 1>, scalar_prefetch = 0 : i64, scratch_operands = 0 : i64, tpu.core_type = #tpu.core_type<tc>, window_params = [{transform_indices = @transform_0, window_bounds = array<i64: 2, 1024>}, {transform_indices = @transform_1, window_bounds = array<i64: 2, 1024>}]} {
    %c0 = arith.constant 0 : index
    %c0_0 = arith.constant 0 : index
    %0 = vector.load %arg1[%c0, %c0_0] : memref<2x1024xf32, #tpu.memory_space<vmem>>, vector<2x1024xf32>
    %cst = arith.constant 0.000000e+00 : f32
    %1 = vector.broadcast %cst : f32 to vector<2x1024xf32>
    %2 = arith.mulf %0, %1 : vector<2x1024xf32>
    %c0_1 = arith.constant 0 : index
    %c0_2 = arith.constant 0 : index
    %3 = vector.load %arg2[%c0_1, %c0_2] : memref<2x1024xf32, #tpu.memory_space<vmem>>, vector<2x1024xf32>
    tpu.vector_store %arg2[%c0_1, %c0_2], %2 {strides = array<i32>} : memref<2x1024xf32, #tpu.memory_space<vmem>>, vector<2x1024xf32>,
    return
  }
  func.func @transform_0(%arg0: i32) -> (i32, i32) {
    %c0_i32 = arith.constant 0 : i32
    %c0_i32_0 = arith.constant 0 : i32
    return %arg0, %c0_i32 : i32, i32
  }
  func.func @transform_1(%arg0: i32) -> (i32, i32) {
    %c0_i32 = arith.constant 0 : i32
    %c0_i32_0 = arith.constant 0 : i32
    return %arg0, %c0_i32 : i32, i32
  }
}

</mosaic_0001>

<llo_original>
// kernel: tpu_custom_call.1
$region0: #{tpu_custom_call.1}
  #allocation0 [shape = 'u32[]', space=smem, size = 0x4, offset = 0x4, fixed_abs, tag = 'smem constant byte address 0x4 - core index']
  #allocation1 [shape = 'u32[72,128]{1,0:T(1,128)}', space=vmem, size = 0x9000, scoped, tag = 'internal scratch']
  %s0 = inlined_call_operand.hbm [shape: f32[2,1024], index: 0, kind: input, shape index: {}]
  %s1 = inlined_call_operand.hbm [shape: f32[2,1024], index: 1, kind: output, shape index: {}]
  %s2 = sld [smem:[#allocation0]]
  $region18: #{tpu_custom_call.1} parent=0
    _
  %s4 = ssub.s32 1, %s2
  %s5 = scalar_select 0, %s4, %s2
  $region1: #{tpu_custom_call.1} parent=0
    #allocation2 [shape = 'u8[8192]{0}', space=vmem, size = 0x2000, scoped, tag = 'input window, operand 0, single buffered']
    #allocation3 [shape = 's32[1]{0}', space=sflag, size = 0x4, scoped, tag = 'scoped memory for tpu_custom_call.1']
    #allocation4 [shape = 's32[1]{0}', space=sflag, size = 0x4, scoped, tag = 'scoped memory for tpu_custom_call.1']
    #allocation5 [shape = 'u8[8192]{0}', space=vmem, size = 0x2000, scoped, tag = 'output window, operand 0, single buffered']
    %6 = vsyncpa [#allocation3], 0
    %7 = vsyncpa [#allocation4], 0
    // Predicated region
    $region2: #{tpu_custom_call.1} parent=1 // pred_check
      _
    $region3: #{tpu_custom_call.1} parent=1 // pred_check_branch
      %9 = sbr.rel (0) target = $region5
    $region4: #{tpu_custom_call.1} parent=1 // pred_region
      %11 = vsyncadd [#allocation3], 0
      %s13 = sshll.u32 %s0, 4
      %s14 = int_to_ptr.hbm [resolvable:$true] %s13
      %s15 = sshll.u32 [#allocation2], 4
      %s16 = int_to_ptr.vmem [resolvable:$true] %s15
      %18 = dma.hbm_to_vmem [thread:$0]  %s14, 256, %s16, [#allocation3]
    $region5: #{tpu_custom_call.1} parent=1 // pred_fallthru
      _
    // Predicated region
    $region6: #{tpu_custom_call.1} parent=1 // pred_check
      _
    $region7: #{tpu_custom_call.1} parent=1 // pred_check_branch
      %20 = sbr.rel (0) target = $region9
    $region8: #{tpu_custom_call.1} parent=1 // pred_region
      %22 = dma.done [#allocation3], 256
    $region9: #{tpu_custom_call.1} parent=1 // pred_fallthru
      _
    %v23 = vld [vmem:[#allocation2] sm:$0xff]
    %v24 = vld [vmem:[#allocation2 + $0x8] sm:$0xff]
    %v25 = vmul.f32 %v23, 0.0
    %v26 = vmul.f32 %v24, 0.0
    %27 = vst [vmem:[#allocation5] sm:$0xff] %v25
    %28 = vst [vmem:[#allocation5 + $0x8] sm:$0xff] %v26
    // Predicated region
    $region10: #{tpu_custom_call.1} parent=1 // pred_check
      _
    $region11: #{tpu_custom_call.1} parent=1 // pred_check_branch
      %30 = sbr.rel (0) target = $region13
    $region12: #{tpu_custom_call.1} parent=1 // pred_region
      %32 = vsyncadd [#allocation4], 0
      %s34 = sshll.u32 [#allocation5], 4
      %s35 = int_to_ptr.vmem [resolvable:$true] %s34
      %s36 = sshll.u32 %s1, 4
      %s37 = int_to_ptr.hbm [resolvable:$true] %s36
      %39 = dma.vmem_to_hbm [thread:$0]  %s35, 256, %s37, [#allocation4]
    $region13: #{tpu_custom_call.1} parent=1 // pred_fallthru
      _
    // Predicated region
    $region14: #{tpu_custom_call.1} parent=1 // pred_check
      _
    $region15: #{tpu_custom_call.1} parent=1 // pred_check_branch
      %41 = sbr.rel (0) target = $region17
    $region16: #{tpu_custom_call.1} parent=1 // pred_region
      %43 = dma.done [#allocation4], 256
    $region17: #{tpu_custom_call.1} parent=1 // pred_fallthru
      _
    %44 = vsyncpa [#allocation3], 1
    %45 = vsyncpa [#allocation4], 1

</llo_original>
